<compile_context>
chip_gen: v5e
topology: v5e:2x2
jax: 0.10.0
libtpu: 0.0.40
codegen_flags: <defaults>
</compile_context>

<pallas_src>
import math

import jax
import jax.numpy as jnp
from jax.experimental import pallas as pl
from jax.experimental.pallas import tpu as pltpu


# ----------------------------- Pallas kernels --------------------------------

def transformer_stack_kernel(x_ref, wqkv_ref, bqkv_ref, gamma_ref, beta_ref,
                             y_ref, act_ref):
    """One grid step == (batch element b, layer l).

    x_ref    : (1, S, E) f32   token+positional embeddings for batch b
    wqkv_ref : (1, E, 3E) bf16 fused, pre-transposed Q|K|V weight for layer l
    bqkv_ref : (1, 1, 3E) f32  fused Q|K|V bias
    gamma/beta : (1, 1, E) f32 LayerNorm affine params
    y_ref    : (1, S, E) f32   final activation for batch b
    act_ref  : VMEM (S, E) f32 activation carried across the layer axis
    """
    layer = pl.program_id(1)

    @pl.when(layer == 0)
    def _init():
        act_ref[...] = x_ref[0]

    x = act_ref[...]                                      # (S, E) f32
    e = x.shape[-1]

    # fused QKV projection: one MXU push with N = 3E (bf16 in, f32 acc)
    qkv = jnp.dot(x.astype(jnp.bfloat16), wqkv_ref[0],
                  preferred_element_type=jnp.float32) + bqkv_ref[0]
    q = qkv[:, :e]
    k = qkv[:, e:2 * e]
    v = qkv[:, 2 * e:]

    # scores = q @ k^T without materializing a transpose (contract dim1 w/ dim1)
    s = jax.lax.dot_general(q.astype(jnp.bfloat16), k.astype(jnp.bfloat16),
                            (((1,), (1,)), ((), ())),
                            preferred_element_type=jnp.float32)
    s = s * jnp.float32(1.0 / math.sqrt(e))

    # causal mask rebuilt on the fly each layer (iota/compare: idle VPU slots)
    row = jax.lax.broadcasted_iota(jnp.int32, s.shape, 0)
    col = jax.lax.broadcasted_iota(jnp.int32, s.shape, 1)
    s = jnp.where(col <= row, s, jnp.float32(-1e9))       # hard-set, as in torch

    # softmax along last axis (f32); reciprocal goes to the EUP slot
    m = jnp.max(s, axis=-1, keepdims=True)
    ex = jnp.exp(s - m)
    p = ex * pl.reciprocal(jnp.sum(ex, axis=-1, keepdims=True), approx=True)

    ctx = jnp.dot(p.astype(jnp.bfloat16), v.astype(jnp.bfloat16),
                  preferred_element_type=jnp.float32)

    # LayerNorm (eps = 1e-5, matching nn.LayerNorm default), all f32
    mean = jnp.mean(ctx, axis=-1, keepdims=True)
    var = jnp.mean((ctx - mean) ** 2, axis=-1, keepdims=True)
    ln = (ctx - mean) * jax.lax.rsqrt(var + 1e-5) * gamma_ref[0] + beta_ref[0]

    # exact erf-GELU (F.gelu default) + residual
    g = 0.5 * ln * (1.0 + jax.lax.erf(ln * jnp.float32(1.0 / math.sqrt(2.0))))
    new_x = g + x
    act_ref[...] = new_x
    # write the output block every layer so it is always valid regardless of
    # revisited-block writeback semantics
    y_ref[0] = new_x


def logits_kernel(x_ref, embt_ref, o_ref):
    """Tied-embedding projection: (BS, E) @ (E, tV) per V-tile."""
    o_ref[...] = jnp.dot(x_ref[...].astype(jnp.bfloat16), embt_ref[...],
                         preferred_element_type=jnp.float32)


# ----------------------------- wrappers --------------------------------------

def _vmem_limit(bytes_estimate):
    # 2x headroom + 1 MiB, floored at 16 MiB, capped at v7x's 64 MiB physical.
    return int(min(max(2 * bytes_estimate + (1 << 20), 16 << 20), 64 << 20))


def sin_position_encoding(embed_size, max_seq_len):
    position = jnp.arange(max_seq_len, dtype=jnp.float32)[:, None]
    div_term = jnp.exp(jnp.arange(0, embed_size, 2, dtype=jnp.float32)
                       * (-math.log(10000.0) / embed_size))
    pe = jnp.zeros((max_seq_len, embed_size), jnp.float32)
    pe = pe.at[:, 0::2].set(jnp.sin(position * div_term))
    pe = pe.at[:, 1::2].set(jnp.cos(position * div_term))
    return pe


def causal_lm_forward(tokens, emb, pe, layer_params):
    B, S = tokens.shape
    V, E = emb.shape
    L = len(layer_params)
    BS = B * S

    # glue: embedding gather + positional encoding (plain JAX outside kernel)
    x = (emb[tokens] + pe[:S, :]).astype(jnp.float32)                 # (B, S, E)

    # one-time weight prep: fuse + pre-transpose QKV, cast weights to bf16,
    # stack all layers so one pallas_call walks them with the layer grid axis
    wqkv_t = jnp.stack([jnp.concatenate([wq.T, wk.T, wv.T], axis=1)
                        for (wq, bq, wk, bk, wv, bv, ga, be) in layer_params]
                       ).astype(jnp.bfloat16)                          # (L, E, 3E)
    bqkv = jnp.stack([jnp.concatenate([bq, bk, bv])[None, :]
                      for (wq, bq, wk, bk, wv, bv, ga, be) in layer_params])  # (L, 1, 3E)
    gamma = jnp.stack([ga[None, :] for (*_, ga, be) in layer_params])         # (L, 1, E)
    beta = jnp.stack([be[None, :] for (*_, ga, be) in layer_params])          # (L, 1, E)
    emb_t = emb.T.astype(jnp.bfloat16)                                        # (E, V)

    # ---- call 1: transformer stack -------------------------------------
    stack_bytes = (2 * S * E * 4          # x (double-buffered)
                   + 2 * E * 3 * E * 2    # fused bf16 weight tile (double-buffered)
                   + 2 * 3 * E * 4 + 4 * E * 4
                   + 2 * S * E * 4        # output block
                   + S * E * 4)           # activation scratch
    y = pl.pallas_call(
        transformer_stack_kernel,
        out_shape=jax.ShapeDtypeStruct((B, S, E), jnp.float32),
        grid=(B, L),
        in_specs=[
            pl.BlockSpec((1, S, E), lambda b, l: (b, 0, 0)),        # activations in
            pl.BlockSpec((1, E, 3 * E), lambda b, l: (l, 0, 0)),    # fused W_qkv^T (bf16)
            pl.BlockSpec((1, 1, 3 * E), lambda b, l: (l, 0, 0)),    # fused bias
            pl.BlockSpec((1, 1, E), lambda b, l: (l, 0, 0)),        # LayerNorm gamma
            pl.BlockSpec((1, 1, E), lambda b, l: (l, 0, 0)),        # LayerNorm beta
        ],
        out_specs=pl.BlockSpec((1, S, E), lambda b, l: (b, 0, 0)),
        scratch_shapes=[pltpu.VMEM((S, E), jnp.float32)],           # layer-carried act
        compiler_params=pltpu.CompilerParams(
            dimension_semantics=("parallel", "arbitrary"),          # batch || , layer carry
            vmem_limit_bytes=_vmem_limit(stack_bytes)),
    )(x, wqkv_t, bqkv, gamma, beta)

    # ---- call 2: tied-embedding logits, V-tiled -------------------------
    tV = V if V <= 512 else 512            # multiple of 128 (>=512) at real sizes
    assert V % tV == 0
    x_flat = y.reshape(BS, E)
    logits_bytes = 2 * BS * E * 4 + 2 * E * tV * 2 + 2 * BS * tV * 4
    logits = pl.pallas_call(
        logits_kernel,
        out_shape=jax.ShapeDtypeStruct((BS, V), jnp.float32),
        grid=(V // tV,),
        in_specs=[
            pl.BlockSpec((BS, E), lambda v: (0, 0)),                # final activations
            pl.BlockSpec((E, tV), lambda v: (0, v)),                # emb^T V-tile (bf16)
        ],
        out_specs=pl.BlockSpec((BS, tV), lambda v: (0, v)),         # lane-dense store
        compiler_params=pltpu.CompilerParams(
            dimension_semantics=("parallel",),
            vmem_limit_bytes=_vmem_limit(logits_bytes)),
    )(x_flat, emb_t)

    return logits.reshape(B, S, V)


# ----------------------------- pure-JAX reference ---------------------------

def ref_forward(tokens, emb, pe, layer_params):
    x = emb[tokens] + pe[: tokens.shape[1], :]
    S = x.shape[1]
    for (wq, bq, wk, bk, wv, bv, gamma, beta) in layer_params:
        q = x @ wq.T + bq
        k = x @ wk.T + bk
        v = x @ wv.T + bv
        s = jnp.einsum("bqe,bke->bqk", q, k) / math.sqrt(x.shape[-1])
        mask = jnp.tril(jnp.ones((S, S), jnp.float32))
        s = jnp.where(mask == 0, jnp.float32(-1e9), s)
        p = jax.nn.softmax(s, axis=-1)
        ctx = jnp.einsum("bqk,bke->bqe", p, v)
        mean = ctx.mean(-1, keepdims=True)
        var = ((ctx - mean) ** 2).mean(-1, keepdims=True)
        ln = (ctx - mean) / jnp.sqrt(var + 1e-5) * gamma + beta
        g = 0.5 * ln * (1.0 + jax.lax.erf(ln / jnp.sqrt(2.0)))
        x = g + x
    return jnp.einsum("bse,ve->bsv", x, emb)


# ----------------------------- main ------------------------------------------

if __name__ == "__main__":
    B, S, E, V, L = 2, 8, 32, 64, 2       # S <= max_seq_len (20)

    key = jax.random.PRNGKey(0)
    k_emb, k_tok, *k_layers = jax.random.split(key, 2 + L)

    emb = jax.random.normal(k_emb, (V, E), jnp.float32)         # torch.randn(V, E)
    tokens = jax.random.randint(k_tok, (B, S), 0, V)

    layer_params = []
    for kl in k_layers:
        kq, kk, kv, kbq, kbk, kbv = jax.random.split(kl, 6)
        bound = 1.0 / math.sqrt(E)
        wq = jax.random.uniform(kq, (E, E), jnp.float32, -bound, bound)
        wk = jax.random.uniform(kk, (E, E), jnp.float32, -bound, bound)
        wv = jax.random.uniform(kv, (E, E), jnp.float32, -bound, bound)
        bq = jax.random.uniform(kbq, (E,), jnp.float32, -bound, bound)
        bk = jax.random.uniform(kbk, (E,), jnp.float32, -bound, bound)
        bv = jax.random.uniform(kbv, (E,), jnp.float32, -bound, bound)
        gamma = jnp.ones((E,), jnp.float32)
        beta = jnp.zeros((E,), jnp.float32)
        layer_params.append((wq, bq, wk, bk, wv, bv, gamma, beta))

    pe = sin_position_encoding(E, 20)

    logits = causal_lm_forward(tokens, emb, pe, layer_params)
    logits = jax.block_until_ready(logits)

    expected = ref_forward(tokens, emb, pe, layer_params)
    assert logits.shape == (B, S, V)

    # kernel uses bf16 MXU inputs (f32 accumulation); compare against the f32
    # reference with a tolerance sized for bf16 rounding at the dot boundaries
    max_err = float(jnp.max(jnp.abs(logits - expected)))
    scale = float(jnp.max(jnp.abs(expected)))
    assert max_err <= 0.03 * scale + 1e-3, (max_err, scale)

    print("KERNEL_OK")
</pallas_src>

<mosaic_0001>
module attributes {stable_mosaic.version = 11 : i64} {
  func.func @transformer_stack_kernel(%arg0: i32, %arg1: i32, %arg2: memref<1x8x32xf32, #tpu.memory_space<vmem>>, %arg3: memref<1x32x96xbf16, #tpu.memory_space<vmem>>, %arg4: memref<1x1x96xf32, #tpu.memory_space<vmem>>, %arg5: memref<1x1x32xf32, #tpu.memory_space<vmem>>, %arg6: memref<1x1x32xf32, #tpu.memory_space<vmem>>, %arg7: memref<1x8x32xf32, #tpu.memory_space<vmem>>, %arg8: memref<8x32xf32, #tpu.memory_space<vmem>>) attributes {dimension_semantics = [#tpu.dimension_semantics<parallel>, #tpu.dimension_semantics<arbitrary>], iteration_bounds = array<i64: 2, 2>, scalar_prefetch = 0 : i64, scratch_operands = 1 : i64, tpu.core_type = #tpu.core_type<tc>, window_params = [{transform_indices = @transform_0, window_bounds = array<i64: 1, 8, 32>}, {transform_indices = @transform_1, window_bounds = array<i64: 1, 32, 96>}, {transform_indices = @transform_2, window_bounds = array<i64: 1, 1, 96>}, {transform_indices = @transform_3, window_bounds = array<i64: 1, 1, 32>}, {transform_indices = @transform_4, window_bounds = array<i64: 1, 1, 32>}, {transform_indices = @transform_5, window_bounds = array<i64: 1, 8, 32>}]} {
    %c0_i32 = arith.constant 0 : i32
    %0 = arith.cmpi eq, %arg1, %c0_i32 : i32
    %1 = arith.extui %0 : i1 to i32
    %c0_i32_0 = arith.constant 0 : i32
    %2 = arith.cmpi ne, %1, %c0_i32_0 : i32
    scf.if %2 {
      %c0_33 = arith.constant 0 : index
      %c0_34 = arith.constant 0 : index
      %c0_35 = arith.constant 0 : index
      %77 = vector.load %arg2[%c0_33, %c0_34, %c0_35] : memref<1x8x32xf32, #tpu.memory_space<vmem>>, vector<1x8x32xf32>
      %78 = vector.shape_cast %77 : vector<1x8x32xf32> to vector<8x32xf32>
      %c0_36 = arith.constant 0 : index
      %c0_37 = arith.constant 0 : index
      %79 = vector.load %arg8[%c0_36, %c0_37] : memref<8x32xf32, #tpu.memory_space<vmem>>, vector<8x32xf32>
      tpu.vector_store %arg8[%c0_36, %c0_37], %78 {strides = array<i32>} : memref<8x32xf32, #tpu.memory_space<vmem>>, vector<8x32xf32>,
    } else {
    }
    %c0 = arith.constant 0 : index
    %c0_1 = arith.constant 0 : index
    %3 = vector.load %arg8[%c0, %c0_1] : memref<8x32xf32, #tpu.memory_space<vmem>>, vector<8x32xf32>
    %4 = arith.truncf %3 : vector<8x32xf32> to vector<8x32xbf16>
    %c0_2 = arith.constant 0 : index
    %c0_3 = arith.constant 0 : index
    %c0_4 = arith.constant 0 : index
    %5 = vector.load %arg3[%c0_2, %c0_3, %c0_4] : memref<1x32x96xbf16, #tpu.memory_space<vmem>>, vector<1x32x96xbf16>
    %6 = vector.shape_cast %5 : vector<1x32x96xbf16> to vector<32x96xbf16>
    %cst = arith.constant dense<0.000000e+00> : vector<8x96xf32>
    %7 = tpu.matmul %4, %6, %cst {dimension_numbers = #tpu.dot_dimension_numbers<[1], [0], [0], [1], [0, 0, 1, 1], [], []>} : vector<8x32xbf16>, vector<32x96xbf16>, vector<8x96xf32> -> vector<8x96xf32>
    %c0_5 = arith.constant 0 : index
    %c0_6 = arith.constant 0 : index
    %c0_7 = arith.constant 0 : index
    %8 = vector.load %arg4[%c0_5, %c0_6, %c0_7] : memref<1x1x96xf32, #tpu.memory_space<vmem>>, vector<1x1x96xf32>
    %9 = vector.shape_cast %8 : vector<1x1x96xf32> to vector<1x96xf32>
    %10 = vector.broadcast %9 : vector<1x96xf32> to vector<8x96xf32>
    %11 = arith.addf %7, %10 : vector<8x96xf32>
    %12 = vector.extract_strided_slice %11 {offsets = [0, 0], sizes = [8, 32], strides = [1, 1]} : vector<8x96xf32> to vector<8x32xf32>
    %13 = vector.extract_strided_slice %11 {offsets = [0, 32], sizes = [8, 32], strides = [1, 1]} : vector<8x96xf32> to vector<8x32xf32>
    %14 = vector.extract_strided_slice %11 {offsets = [0, 64], sizes = [8, 32], strides = [1, 1]} : vector<8x96xf32> to vector<8x32xf32>
    %15 = arith.truncf %12 : vector<8x32xf32> to vector<8x32xbf16>
    %16 = arith.truncf %13 : vector<8x32xf32> to vector<8x32xbf16>
    %cst_8 = arith.constant dense<0.000000e+00> : vector<8x8xf32>
    %17 = tpu.matmul %15, %16, %cst_8 {dimension_numbers = #tpu.dot_dimension_numbers<[1], [1], [0], [0], [0, 0, 1, 0], [], []>} : vector<8x32xbf16>, vector<8x32xbf16>, vector<8x8xf32> -> vector<8x8xf32>
    %cst_9 = arith.constant 0.176776692 : f32
    %18 = vector.broadcast %cst_9 : f32 to vector<8x8xf32>
    %19 = arith.mulf %17, %18 : vector<8x8xf32>
    %20 = tpu.iota {dimensions = array<i32: 0>} : vector<8x8xi32>
    %21 = tpu.iota {dimensions = array<i32: 1>} : vector<8x8xi32>
    %22 = arith.cmpi sle, %21, %20 : vector<8x8xi32>
    %cst_10 = arith.constant -1.000000e+09 : f32
    %23 = vector.broadcast %cst_10 : f32 to vector<8x8xf32>
    %24 = arith.select %22, %19, %23 : vector<8x8xi1>, vector<8x8xf32>
    %cst_11 = arith.constant dense<0xFF800000> : vector<8xf32>
    %25 = vector.multi_reduction <maximumf>, %24, %cst_11 [1] : vector<8x8xf32> to vector<8xf32>
    %26 = vector.shape_cast %25 : vector<8xf32> to vector<8x1xf32>
    %27 = vector.broadcast %26 : vector<8x1xf32> to vector<8x8xf32>
    %28 = arith.subf %24, %27 : vector<8x8xf32>
    %29 = math.exp %28 : vector<8x8xf32>
    %cst_12 = arith.constant dense<0.000000e+00> : vector<8xf32>
    %30 = vector.multi_reduction <add>, %29, %cst_12 [1] : vector<8x8xf32> to vector<8xf32>
    %31 = vector.shape_cast %30 : vector<8xf32> to vector<8x1xf32>
    %32 = tpu.reciprocal %31 {approx = true} : vector<8x1xf32> -> vector<8x1xf32>
    %33 = vector.broadcast %32 : vector<8x1xf32> to vector<8x8xf32>
    %34 = arith.mulf %29, %33 : vector<8x8xf32>
    %35 = arith.truncf %34 : vector<8x8xf32> to vector<8x8xbf16>
    %36 = arith.truncf %14 : vector<8x32xf32> to vector<8x32xbf16>
    %cst_13 = arith.constant dense<0.000000e+00> : vector<8x32xf32>
    %37 = tpu.matmul %35, %36, %cst_13 {dimension_numbers = #tpu.dot_dimension_numbers<[1], [0], [0], [1], [0, 0, 1, 1], [], []>} : vector<8x8xbf16>, vector<8x32xbf16>, vector<8x32xf32> -> vector<8x32xf32>
    %cst_14 = arith.constant dense<0.000000e+00> : vector<8xf32>
    %38 = vector.multi_reduction <add>, %37, %cst_14 [1] : vector<8x32xf32> to vector<8xf32>
    %39 = vector.shape_cast %38 : vector<8xf32> to vector<8x1xf32>
    %cst_15 = arith.constant 3.200000e+01 : f32
    %40 = vector.broadcast %cst_15 : f32 to vector<8x1xf32>
    %41 = arith.divf %39, %40 : vector<8x1xf32>
    %42 = vector.broadcast %41 : vector<8x1xf32> to vector<8x32xf32>
    %43 = arith.subf %37, %42 : vector<8x32xf32>
    %44 = arith.mulf %43, %43 : vector<8x32xf32>
    %cst_16 = arith.constant dense<0.000000e+00> : vector<8xf32>
    %45 = vector.multi_reduction <add>, %44, %cst_16 [1] : vector<8x32xf32> to vector<8xf32>
    %46 = vector.shape_cast %45 : vector<8xf32> to vector<8x1xf32>
    %cst_17 = arith.constant 3.200000e+01 : f32
    %47 = vector.broadcast %cst_17 : f32 to vector<8x1xf32>
    %48 = arith.divf %46, %47 : vector<8x1xf32>
    %49 = vector.broadcast %41 : vector<8x1xf32> to vector<8x32xf32>
    %50 = arith.subf %37, %49 : vector<8x32xf32>
    %cst_18 = arith.constant 9.99999974E-6 : f32
    %51 = vector.broadcast %cst_18 : f32 to vector<8x1xf32>
    %52 = arith.addf %48, %51 : vector<8x1xf32>
    %53 = math.rsqrt %52 : vector<8x1xf32>
    %54 = vector.broadcast %53 : vector<8x1xf32> to vector<8x32xf32>
    %55 = arith.mulf %50, %54 : vector<8x32xf32>
    %c0_19 = arith.constant 0 : index
    %c0_20 = arith.constant 0 : index
    %c0_21 = arith.constant 0 : index
    %56 = vector.load %arg5[%c0_19, %c0_20, %c0_21] : memref<1x1x32xf32, #tpu.memory_space<vmem>>, vector<1x1x32xf32>
    %57 = vector.shape_cast %56 : vector<1x1x32xf32> to vector<1x32xf32>
    %58 = vector.broadcast %57 : vector<1x32xf32> to vector<8x32xf32>
    %59 = arith.mulf %55, %58 : vector<8x32xf32>
    %c0_22 = arith.constant 0 : index
    %c0_23 = arith.constant 0 : index
    %c0_24 = arith.constant 0 : index
    %60 = vector.load %arg6[%c0_22, %c0_23, %c0_24] : memref<1x1x32xf32, #tpu.memory_space<vmem>>, vector<1x1x32xf32>
    %61 = vector.shape_cast %60 : vector<1x1x32xf32> to vector<1x32xf32>
    %62 = vector.broadcast %61 : vector<1x32xf32> to vector<8x32xf32>
    %63 = arith.addf %59, %62 : vector<8x32xf32>
    %cst_25 = arith.constant 5.000000e-01 : f32
    %64 = vector.broadcast %cst_25 : f32 to vector<8x32xf32>
    %65 = arith.mulf %64, %63 : vector<8x32xf32>
    %cst_26 = arith.constant 0.707106769 : f32
    %66 = vector.broadcast %cst_26 : f32 to vector<8x32xf32>
    %67 = arith.mulf %63, %66 : vector<8x32xf32>
    %68 = math.erf %67 : vector<8x32xf32>
    %cst_27 = arith.constant 1.000000e+00 : f32
    %69 = vector.broadcast %cst_27 : f32 to vector<8x32xf32>
    %70 = arith.addf %69, %68 : vector<8x32xf32>
    %71 = arith.mulf %65, %70 : vector<8x32xf32>
    %72 = arith.addf %71, %3 : vector<8x32xf32>
    %c0_28 = arith.constant 0 : index
    %c0_29 = arith.constant 0 : index
    %73 = vector.load %arg8[%c0_28, %c0_29] : memref<8x32xf32, #tpu.memory_space<vmem>>, vector<8x32xf32>
    tpu.vector_store %arg8[%c0_28, %c0_29], %72 {strides = array<i32>} : memref<8x32xf32, #tpu.memory_space<vmem>>, vector<8x32xf32>,
    %c0_30 = arith.constant 0 : index
    %c0_31 = arith.constant 0 : index
    %c0_32 = arith.constant 0 : index
    %74 = vector.load %arg7[%c0_30, %c0_31, %c0_32] : memref<1x8x32xf32, #tpu.memory_space<vmem>>, vector<1x8x32xf32>
    %75 = vector.shape_cast %74 : vector<1x8x32xf32> to vector<8x32xf32>
    %76 = vector.shape_cast %72 : vector<8x32xf32> to vector<1x8x32xf32>
    tpu.vector_store %arg7[%c0_30, %c0_31, %c0_32], %76 {strides = array<i32>} : memref<1x8x32xf32, #tpu.memory_space<vmem>>, vector<1x8x32xf32>,
    return
  }
  func.func @transform_0(%arg0: i32, %arg1: i32) -> (i32, i32, i32) {
    %c0_i32 = arith.constant 0 : i32
    %c0_i32_0 = arith.constant 0 : i32
    %c0_i32_1 = arith.constant 0 : i32
    return %arg0, %c0_i32, %c0_i32_0 : i32, i32, i32
  }
  func.func @transform_1(%arg0: i32, %arg1: i32) -> (i32, i32, i32) {
    %c0_i32 = arith.constant 0 : i32
    %c0_i32_0 = arith.constant 0 : i32
    %c0_i32_1 = arith.constant 0 : i32
    return %arg1, %c0_i32, %c0_i32_0 : i32, i32, i32
  }
  func.func @transform_2(%arg0: i32, %arg1: i32) -> (i32, i32, i32) {
    %c0_i32 = arith.constant 0 : i32
    %c0_i32_0 = arith.constant 0 : i32
    %c0_i32_1 = arith.constant 0 : i32
    return %arg1, %c0_i32, %c0_i32_0 : i32, i32, i32
  }
  func.func @transform_3(%arg0: i32, %arg1: i32) -> (i32, i32, i32) {
    %c0_i32 = arith.constant 0 : i32
    %c0_i32_0 = arith.constant 0 : i32
    %c0_i32_1 = arith.constant 0 : i32
    return %arg1, %c0_i32, %c0_i32_0 : i32, i32, i32
  }
  func.func @transform_4(%arg0: i32, %arg1: i32) -> (i32, i32, i32) {
    %c0_i32 = arith.constant 0 : i32
    %c0_i32_0 = arith.constant 0 : i32
    %c0_i32_1 = arith.constant 0 : i32
    return %arg1, %c0_i32, %c0_i32_0 : i32, i32, i32
  }
  func.func @transform_5(%arg0: i32, %arg1: i32) -> (i32, i32, i32) {
    %c0_i32 = arith.constant 0 : i32
    %c0_i32_0 = arith.constant 0 : i32
    %c0_i32_1 = arith.constant 0 : i32
    return %arg0, %c0_i32, %c0_i32_0 : i32, i32, i32
  }
}

</mosaic_0001>

<llo_original>
// kernel: tpu_custom_call.1
$region0: #{tpu_custom_call.1}
  #allocation0 [shape = 'u32[]', space=smem, size = 0x4, offset = 0x4, fixed_abs, tag = 'smem constant byte address 0x4 - core index']
  #allocation1 [shape = 'u32[72,128]{1,0:T(1,128)}', space=vmem, size = 0x9000, scoped, tag = 'internal scratch']
  #allocation2 [shape = 'f32[8,32]{1,0:T(8,128)}', space=vmem, size = 0x1000, scoped, tag = 'scratch operand']
  %s0 = inlined_call_operand.hbm [shape: f32[2,8,32], index: 0, kind: input, shape index: {}]
  %s1 = inlined_call_operand.hbm [shape: bf16[2,32,96], index: 1, kind: input, shape index: {}]
  %s2 = inlined_call_operand.hbm [shape: f32[2,1,96], index: 2, kind: input, shape index: {}]
  %s3 = inlined_call_operand.vmem [shape: f32[2,1,32], index: 3, kind: input, shape index: {}]
  %s4 = inlined_call_operand.hbm [shape: f32[2,1,32], index: 4, kind: input, shape index: {}]
  %s5 = inlined_call_operand.hbm [shape: f32[2,8,32], index: 5, kind: output, shape index: {}]
  %s6 = sld [smem:[#allocation0]]
  $region73: #{tpu_custom_call.1} parent=0
    _
  %s8 = ssub.s32 1, %s6
  %s9 = scalar_select 0, %s8, %s6
  $region1: #{tpu_custom_call.1} parent=0
    #allocation3 [shape = 'u8[8192]{0}', space=vmem, size = 0x2000, scoped, tag = 'input window, operand 0']
    #allocation4 [shape = 's32[2]{0}', space=sflag, size = 0x8, scoped, tag = 'scoped memory for tpu_custom_call.1']
    #allocation5 [shape = 's32[2]{0}', space=sflag, size = 0x8, scoped, tag = 'scoped memory for tpu_custom_call.1']
    #allocation6 [shape = 'u8[16384]{0}', space=vmem, size = 0x4000, scoped, tag = 'input window, operand 1']
    #allocation7 [shape = 's32[2]{0}', space=sflag, size = 0x8, scoped, tag = 'scoped memory for tpu_custom_call.1']
    #allocation8 [shape = 'u8[1024]{0}', space=vmem, size = 0x400, scoped, tag = 'input window, operand 2']
    #allocation9 [shape = 'u8[1024]{0}', space=vmem, size = 0x400, scoped, tag = 'input window, operand 4']
    #allocation10 [shape = 's32[2]{0}', space=sflag, size = 0x8, scoped, tag = 'scoped memory for tpu_custom_call.1']
    #allocation11 [shape = 'u8[8192]{0}', space=vmem, size = 0x2000, scoped, tag = 'output window, operand 0']
    %10 = vsyncpa [#allocation4], 0
    %s11 = scalar_lea.sflag [#allocation4], 1
    %12 = vsyncpa %s11, 0
    %13 = vsyncpa [#allocation7], 0
    %s14 = scalar_lea.sflag [#allocation7], 1
    %15 = vsyncpa %s14, 0
    %16 = vsyncpa [#allocation10], 0
    %s17 = scalar_lea.sflag [#allocation10], 1
    %18 = vsyncpa %s17, 0
    %19 = vsyncpa [#allocation5], 0
    %s20 = scalar_lea.sflag [#allocation5], 1
    %21 = vsyncpa %s20, 0
    loop: start=0, step=1, limit=6
    $region2: #{tpu_custom_call.1} parent=1 // loop_pre_header
      _
    $region3: #{tpu_custom_call.1} parent=1 // loop_header
      %s23 = sphi 0, %s27
      %p24 = scmp.ge.s32.totalorder %s23, 6
      %s30 = sphi 0, %s42
      %s31 = sphi 0, %s38
      %s32 = sphi 0, %s30
      %s33 = sphi 0, %s31
      %s34 = sphi 0, %s32
      %s35 = sphi 0, %s33
      %s45 = sphi 0, %s47
      %s48 = sphi 0, %s45
      %s49 = sphi 0, %s48
      %s65 = sphi 0, %s49
      %s71 = sphi 0, %s73
      %s74 = sphi 0, %s71
      %s75 = sphi 0, %s74
      %s91 = sphi 0, %s75
      %s97 = sphi 0, %s99
      %s100 = sphi 0, %s97
      %s101 = sphi 0, %s100
      %s117 = sphi 0, %s101
      %s123 = sphi 0, %s125
      %s126 = sphi 0, %s123
      %s127 = sphi 0, %s126
      %s143 = sphi 0, %s127
      %s149 = sphi 0, %s151
      %s152 = sphi 0, %s149
      %s153 = sphi 0, %s152
      %s169 = sphi 0, %s153
      %s175 = sphi 0, %s177
      %s178 = sphi 0, %s175
      %s179 = sphi 0, %s178
      %s195 = sphi 0, %s179
    $region4: #{tpu_custom_call.1} parent=1 // loop_header_branch
      %26 = sbr.rel (%p24) target = $region8
    $region5: #{tpu_custom_call.1} parent=1 // loop_body
      %s28 = ssub.s32 %s23, 1
      %s29 = ssub.s32 %s23, 2
      %s36 = sadd.s32 1, %s31
      %p37 = scmp.ge.s32.totalorder %s36, 2
      %s38 = scalar_select %p37, 0, %s36
      %s39 = sadd.s32 1, %s30
      %s40 = scalar_select %p37, %s39, %s30
      %p41 = scmp.ge.s32.totalorder %s40, 2
      %s42 = scalar_select %p41, 0, %s40
      %s43 = ssub.s32 %s30, %s42
      %p44 = scmp.eq.s32.totalorder %s43, 0
      %s46 = sadd.s32 %s45, 1
      %s47 = scalar_select %p44, %s45, %s46
      %p50 = pneg %p44
      %p51 = scmp.eq.s32.totalorder %s23, 3
      %p52 = por %p50, %p51
      %p53 = scmp.ne.s32.totalorder %s45, %s48
      %p54 = scmp.eq.s32.totalorder %s23, 0
      %p55 = por %p53, %p54
      %p56 = scmp.ne.s32.totalorder %s45, %s48
      %p57 = scmp.eq.s32.totalorder %s28, 3
      %p58 = por %p56, %p57
      %p59 = scmp.ne.s32.totalorder %s48, %s49
      %p60 = scmp.eq.s32.totalorder %s28, 0
      %p61 = por %p59, %p60
      %p62 = scmp.ne.s32.totalorder %s48, %s49
      %p63 = scmp.eq.s32.totalorder %s29, 3
      %p64 = por %p62, %p63
      %p66 = scmp.ne.s32.totalorder %s49, %s65
      %p67 = scmp.eq.s32.totalorder %s29, 0
      %p68 = por %p66, %p67
      %s69 = ssub.s32 %s31, %s38
      %p70 = scmp.eq.s32.totalorder %s69, 0
      %s72 = sadd.s32 %s71, 1
      %s73 = scalar_select %p70, %s71, %s72
      %p76 = pneg %p70
      %p77 = scmp.eq.s32.totalorder %s23, 3
      %p78 = por %p76, %p77
      %p79 = scmp.ne.s32.totalorder %s71, %s74
      %p80 = scmp.eq.s32.totalorder %s23, 0
      %p81 = por %p79, %p80
      %p82 = scmp.ne.s32.totalorder %s71, %s74
      %p83 = scmp.eq.s32.totalorder %s28, 3
      %p84 = por %p82, %p83
      %p85 = scmp.ne.s32.totalorder %s74, %s75
      %p86 = scmp.eq.s32.totalorder %s28, 0
      %p87 = por %p85, %p86
      %p88 = scmp.ne.s32.totalorder %s74, %s75
      %p89 = scmp.eq.s32.totalorder %s29, 3
      %p90 = por %p88, %p89
      %p92 = scmp.ne.s32.totalorder %s75, %s91
      %p93 = scmp.eq.s32.totalorder %s29, 0
      %p94 = por %p92, %p93
      %s95 = ssub.s32 %s31, %s38
      %p96 = scmp.eq.s32.totalorder %s95, 0
      %s98 = sadd.s32 %s97, 1
      %s99 = scalar_select %p96, %s97, %s98
      %p102 = pneg %p96
      %p103 = scmp.eq.s32.totalorder %s23, 3
      %p104 = por %p102, %p103
      %p105 = scmp.ne.s32.totalorder %s97, %s100
      %p106 = scmp.eq.s32.totalorder %s23, 0
      %p107 = por %p105, %p106
      %p108 = scmp.ne.s32.totalorder %s97, %s100
      %p109 = scmp.eq.s32.totalorder %s28, 3
      %p110 = por %p108, %p109
      %p111 = scmp.ne.s32.totalorder %s100, %s101
      %p112 = scmp.eq.s32.totalorder %s28, 0
      %p113 = por %p111, %p112
      %p114 = scmp.ne.s32.totalorder %s100, %s101
      %p115 = scmp.eq.s32.totalorder %s29, 3
      %p116 = por %p114, %p115
      %p118 = scmp.ne.s32.totalorder %s101, %s117
      %p119 = scmp.eq.s32.totalorder %s29, 0
      %p120 = por %p118, %p119
      %s121 = ssub.s32 %s31, %s38
      %p122 = scmp.eq.s32.totalorder %s121, 0
      %s124 = sadd.s32 %s123, 1
      %s125 = scalar_select %p122, %s123, %s124
      %p128 = pneg %p122
      %p129 = scmp.eq.s32.totalorder %s23, 3
      %p130 = por %p128, %p129
      %p131 = scmp.ne.s32.totalorder %s123, %s126
      %p132 = scmp.eq.s32.totalorder %s23, 0
      %p133 = por %p131, %p132
      %p134 = scmp.ne.s32.totalorder %s123, %s126
      %p135 = scmp.eq.s32.totalorder %s28, 3
      %p136 = por %p134, %p135
      %p137 = scmp.ne.s32.totalorder %s126, %s127
      %p138 = scmp.eq.s32.totalorder %s28, 0
      %p139 = por %p137, %p138
      %p140 = scmp.ne.s32.totalorder %s126, %s127
      %p141 = scmp.eq.s32.totalorder %s29, 3
      %p142 = por %p140, %p141
      %p144 = scmp.ne.s32.totalorder %s127, %s143
      %p145 = scmp.eq.s32.totalorder %s29, 0
      %p146 = por %p144, %p145
      %s147 = ssub.s32 %s31, %s38
      %p148 = scmp.eq.s32.totalorder %s147, 0
      %s150 = sadd.s32 %s149, 1
      %s151 = scalar_select %p148, %s149, %s150
      %p154 = pneg %p148
      %p155 = scmp.eq.s32.totalorder %s23, 3
      %p156 = por %p154, %p155
      %p157 = scmp.ne.s32.totalorder %s149, %s152
      %p158 = scmp.eq.s32.totalorder %s23, 0
      %p159 = por %p157, %p158
      %p160 = scmp.ne.s32.totalorder %s149, %s152
      %p161 = scmp.eq.s32.totalorder %s28, 3
      %p162 = por %p160, %p161
      %p163 = scmp.ne.s32.totalorder %s152, %s153
      %p164 = scmp.eq.s32.totalorder %s28, 0
      %p165 = por %p163, %p164
      %p166 = scmp.ne.s32.totalorder %s152, %s153
      %p167 = scmp.eq.s32.totalorder %s29, 3
      %p168 = por %p166, %p167
      %p170 = scmp.ne.s32.totalorder %s153, %s169
      %p171 = scmp.eq.s32.totalorder %s29, 0
      %p172 = por %p170, %p171
      %s173 = ssub.s32 %s30, %s42
      %p174 = scmp.eq.s32.totalorder %s173, 0
      %s176 = sadd.s32 %s175, 1
      %s177 = scalar_select %p174, %s175, %s176
      %p180 = pneg %p174
      %p181 = scmp.eq.s32.totalorder %s23, 3
      %p182 = por %p180, %p181
      %p183 = scmp.ne.s32.totalorder %s175, %s178
      %p184 = scmp.eq.s32.totalorder %s23, 0
      %p185 = por %p183, %p184
      %p186 = scmp.ne.s32.totalorder %s175, %s178
      %p187 = scmp.eq.s32.totalorder %s28, 3
      %p188 = por %p186, %p187
      %p189 = scmp.ne.s32.totalorder %s178, %s179
      %p190 = scmp.eq.s32.totalorder %s28, 0
      %p191 = por %p189, %p190
      %p192 = scmp.ne.s32.totalorder %s178, %s179
      %p193 = scmp.eq.s32.totalorder %s29, 3
      %p194 = por %p192, %p193
      %p196 = scmp.ne.s32.totalorder %s179, %s195
      %p197 = scmp.eq.s32.totalorder %s29, 0
      %p198 = por %p196, %p197
      %p199 = scmp.le.s32.totalorder 1, %s23
      %p200 = scmp.lt.s32.totalorder %s23, 5
      %p201 = pnand %p199, %p200
      %p202 = pneg %p201
      // Predicated region
      $region9: #{tpu_custom_call.1} parent=5 // pred_check
        _
      $region10: #{tpu_custom_call.1} parent=5 // pred_check_branch
        %204 = sbr.rel (%p201) target = $region12
      $region11: #{tpu_custom_call.1} parent=5 // pred_region
        %s205 = ssub.s32 %s23, 1
      $region12: #{tpu_custom_call.1} parent=5 // pred_fallthru
        _
      %p206 = scmp.lt.s32.totalorder %s23, 4
      // Predicated region
      $region13: #{tpu_custom_call.1} parent=5 // pred_check
        %p207 = pneg %p206
      $region14: #{tpu_custom_call.1} parent=5 // pred_check_branch
        %209 = sbr.rel (%p207) target = $region16
      $region15: #{tpu_custom_call.1} parent=5 // pred_region
        // Predicated region
        $region17: #{tpu_custom_call.1} parent=15 // pred_check
          %p210 = pneg %p55
        $region18: #{tpu_custom_call.1} parent=15 // pred_check_branch
          %212 = sbr.rel (%p210) target = $region20
        $region19: #{tpu_custom_call.1} parent=15 // pred_region
          %s213 = sand.u32 %s45, 1
          %s214 = scalar_lea.sflag [#allocation4], %s213
          %s215 = sand.u32 %s45, 1
          %s216 = smul.addr %s215, 8
          %s217 = scalar_lea.vmem [#allocation3], %s216
          %219 = vsyncadd %s214, 0
          %s220 = smul.addr %s30, 8
          %s221 = scalar_lea.hbm %s0, %s220
          %s223 = sshll.u32 %s221, 4
          %s224 = int_to_ptr.hbm [resolvable:$true] %s223
          %s225 = sshll.u32 %s217, 4
          %s226 = int_to_ptr.vmem [resolvable:$true] %s225
          %228 = dma.hbm_to_vmem [thread:$0]  %s224, 128, %s226, %s214
        $region20: #{tpu_custom_call.1} parent=15 // pred_fallthru
          _
        // Predicated region
        $region21: #{tpu_custom_call.1} parent=15 // pred_check
          %p229 = pneg %p81
        $region22: #{tpu_custom_call.1} parent=15 // pred_check_branch
          %231 = sbr.rel (%p229) target = $region24
        $region23: #{tpu_custom_call.1} parent=15 // pred_region
          %s232 = sand.u32 %s23, 1
          %s233 = scalar_lea.sflag [#allocation7], %s232
          %s234 = sand.u32 %s71, 1
          %s235 = smul.addr %s234, 16
          %s236 = scalar_lea.vmem [#allocation6], %s235
          %238 = vsyncadd %s233, 0
          %s239 = smul.addr %s31, 4
          %s240 = smul.addr %s239, 4
          %s241 = scalar_lea.hbm %s1, %s240
          %s242 = sshll.u32 %s241, 4
          %s243 = int_to_ptr.hbm [resolvable:$true] %s242
          %s244 = sshll.u32 %s236, 4
          %s245 = int_to_ptr.vmem [resolvable:$true] %s244
          %250 = dma.hbm_to_vmem [thread:$0]  %s243, 256, %s245, %s233, 64, 64, 4
        $region24: #{tpu_custom_call.1} parent=15 // pred_fallthru
          _
        // Predicated region
        $region25: #{tpu_custom_call.1} parent=15 // pred_check
          %p251 = pneg %p107
        $region26: #{tpu_custom_call.1} parent=15 // pred_check_branch
          %253 = sbr.rel (%p251) target = $region28
        $region27: #{tpu_custom_call.1} parent=15 // pred_region
          %s254 = sand.u32 %s23, 1
          %s255 = scalar_lea.sflag [#allocation7], %s254
          %s256 = sand.u32 %s97, 1
          %s257 = scalar_lea.vmem [#allocation8], %s256
          %259 = vsyncadd %s255, 0
          %s260 = scalar_lea.hbm %s2, %s31
          %s262 = sshll.u32 %s260, 4
          %s263 = int_to_ptr.hbm [resolvable:$true] %s262
          %s264 = sshll.u32 %s257, 4
          %s265 = int_to_ptr.vmem [resolvable:$true] %s264
          %267 = dma.hbm_to_vmem [thread:$0]  %s263, 16, %s265, %s255
        $region28: #{tpu_custom_call.1} parent=15 // pred_fallthru
          _
        // Predicated region
        $region29: #{tpu_custom_call.1} parent=15 // pred_check
          %p268 = pneg %p133
        $region30: #{tpu_custom_call.1} parent=15 // pred_check_branch
          %270 = sbr.rel (%p268) target = $region32
        $region31: #{tpu_custom_call.1} parent=15 // pred_region
          %p271 = scmp.lt.s32.totalorder %s31, 1
          %s272 = scalar_select %p271, %s31, 1
          %s273 = scalar_lea.vmem %s3, %s272
        $region32: #{tpu_custom_call.1} parent=15 // pred_fallthru
          _
        // Predicated region
        $region33: #{tpu_custom_call.1} parent=15 // pred_check
          %p274 = pneg %p159
        $region34: #{tpu_custom_call.1} parent=15 // pred_check_branch
          %276 = sbr.rel (%p274) target = $region36
        $region35: #{tpu_custom_call.1} parent=15 // pred_region
          %s277 = sand.u32 %s149, 1
          %s278 = scalar_lea.sflag [#allocation10], %s277
          %s279 = sand.u32 %s149, 1
          %s280 = scalar_lea.vmem [#allocation9], %s279
          %282 = vsyncadd %s278, 0
          %s283 = scalar_lea.hbm %s4, %s31
          %s285 = sshll.u32 %s283, 4
          %s286 = int_to_ptr.hbm [resolvable:$true] %s285
          %s287 = sshll.u32 %s280, 4
          %s288 = int_to_ptr.vmem [resolvable:$true] %s287
          %290 = dma.hbm_to_vmem [thread:$0]  %s286, 16, %s288, %s278
        $region36: #{tpu_custom_call.1} parent=15 // pred_fallthru
          _
      $region16: #{tpu_custom_call.1} parent=5 // pred_fallthru
        _
      %p291 = scmp.le.s32.totalorder 1, %s23
      %p292 = scmp.lt.s32.totalorder %s23, 5
      %p293 = pnand %p291, %p292
      %p294 = pneg %p293
      // Predicated region
      $region37: #{tpu_custom_call.1} parent=5 // pred_check
        _
      $region38: #{tpu_custom_call.1} parent=5 // pred_check_branch
        %296 = sbr.rel (%p293) target = $region40
      $region39: #{tpu_custom_call.1} parent=5 // pred_region
        %s297 = ssub.s32 %s23, 1
        %s298 = sand.u32 %s48, 1
        %s299 = scalar_lea.sflag [#allocation4], %s298
        %s300 = sand.u32 %s48, 1
        %s301 = smul.addr %s300, 8
        %s302 = scalar_lea.vmem [#allocation3], %s301
        // Predicated region
        $region41: #{tpu_custom_call.1} parent=39 // pred_check
          %p303 = pneg %p61
        $region42: #{tpu_custom_call.1} parent=39 // pred_check_branch
          %305 = sbr.rel (%p303) target = $region44
        $region43: #{tpu_custom_call.1} parent=39 // pred_region
          %307 = dma.done %s299, 128
        $region44: #{tpu_custom_call.1} parent=39 // pred_fallthru
          _
        %s308 = sand.u32 %s28, 1
        %s309 = scalar_lea.sflag [#allocation7], %s308
        %s310 = sand.u32 %s74, 1
        %s311 = smul.addr %s310, 16
        %s312 = scalar_lea.vmem [#allocation6], %s311
        // Predicated region
        $region45: #{tpu_custom_call.1} parent=39 // pred_check
          %p313 = pneg %p87
        $region46: #{tpu_custom_call.1} parent=39 // pred_check_branch
          %315 = sbr.rel (%p313) target = $region48
        $region47: #{tpu_custom_call.1} parent=39 // pred_region
          %317 = dma.done %s309, 256
        $region48: #{tpu_custom_call.1} parent=39 // pred_fallthru
          _
        %s318 = sand.u32 %s28, 1
        %s319 = scalar_lea.sflag [#allocation7], %s318
        %s320 = sand.u32 %s100, 1
        %s321 = scalar_lea.vmem [#allocation8], %s320
        // Predicated region
        $region49: #{tpu_custom_call.1} parent=39 // pred_check
          %p322 = pneg %p113
        $region50: #{tpu_custom_call.1} parent=39 // pred_check_branch
          %324 = sbr.rel (%p322) target = $region52
        $region51: #{tpu_custom_call.1} parent=39 // pred_region
          %326 = dma.done %s319, 16
        $region52: #{tpu_custom_call.1} parent=39 // pred_fallthru
          _
        %s327 = sand.u32 %s152, 1
        %s328 = scalar_lea.sflag [#allocation10], %s327
        %s329 = sand.u32 %s152, 1
        %s330 = scalar_lea.vmem [#allocation9], %s329
        // Predicated region
        $region53: #{tpu_custom_call.1} parent=39 // pred_check
          %p331 = pneg %p165
        $region54: #{tpu_custom_call.1} parent=39 // pred_check_branch
          %333 = sbr.rel (%p331) target = $region56
        $region55: #{tpu_custom_call.1} parent=39 // pred_region
          %335 = dma.done %s328, 16
        $region56: #{tpu_custom_call.1} parent=39 // pred_fallthru
          _
        %s336 = sand.u32 %s48, 1
        %s337 = scalar_lea.sflag [#allocation4], %s336
        %s338 = sand.u32 %s48, 1
        %s339 = smul.addr %s338, 8
        %s340 = scalar_lea.vmem [#allocation3], %s339
        %p341 = pneg %p61
        %p342 = pneg %p58
        %s343 = sand.u32 %s28, 1
        %s344 = scalar_lea.sflag [#allocation7], %s343
        %s345 = sand.u32 %s74, 1
        %s346 = smul.addr %s345, 16
        %s347 = scalar_lea.vmem [#allocation6], %s346
        %p348 = pneg %p87
        %p349 = pneg %p84
        %s350 = sand.u32 %s28, 1
        %s351 = scalar_lea.sflag [#allocation7], %s350
        %s352 = sand.u32 %s100, 1
        %s353 = scalar_lea.vmem [#allocation8], %s352
        %p354 = pneg %p113
        %p355 = pneg %p110
        %p356 = scmp.lt.s32.totalorder %s33, 1
        %s357 = scalar_select %p356, %s33, 1
        %s358 = scalar_lea.vmem %s3, %s357
        %p359 = pneg %p139
        %p360 = pneg %p136
        %s361 = sand.u32 %s152, 1
        %s362 = scalar_lea.sflag [#allocation10], %s361
        %s363 = sand.u32 %s152, 1
        %s364 = scalar_lea.vmem [#allocation9], %s363
        %p365 = pneg %p165
        %p366 = pneg %p162
        %p367 = pneg %p191
        %p368 = pneg %p188
        %s369 = sand.u32 %s178, 1
        %s370 = scalar_lea.sflag [#allocation5], %s369
        %s371 = sand.u32 %s178, 1
        %s372 = smul.addr %s371, 8
        %s373 = scalar_lea.vmem [#allocation11], %s372
        %p374 = scmp.lt.s32.totalorder %s33, 1
        %s375 = scalar_select %p374, %s33, 1
        %s376 = scalar_lea.vmem %s3, %s375
        %p378 = scmp.eq.s32.totalorder %s33, 0
        // Predicated region
        $region57: #{tpu_custom_call.1} parent=39 // pred_check
          %p379 = pneg %p378
        $region58: #{tpu_custom_call.1} parent=39 // pred_check_branch
          %381 = sbr.rel (%p379) target = $region60
        $region59: #{tpu_custom_call.1} parent=39 // pred_region
          %v382 = vld [vmem:[%s302] sm:$0xff]
          %vm383 = vcmask 261120
          %384 = vst.msk [vmem:[#allocation2] sm:$0xff] %vm383, %v382
        $region60: #{tpu_custom_call.1} parent=39 // pred_fallthru
          _
        %v385 = vld [vmem:[#allocation2] sm:$0xff]
        %v386 = vpack.c.bf16 %v385, %v385
        %v387 = vld [vmem:[%s312] sm:$0xf]
        %v388 = vld [vmem:[%s312 + $0x4] sm:$0xf]
        %v389 = vld [vmem:[%s312 + $0x8] sm:$0xf]
        %v390 = vld [vmem:[%s312 + $0xc] sm:$0xf]
        %v391 = vld [vmem:[%s321] sm:$0x1]
        %v393 = vperm.slane %v391, 0
        %v399 = vunpack.c.l.b16 %v387
        %v400 = vunpack.c.l.b16 %v388
        %v401 = vunpack.c.l.b16 %v389
        %v402 = vunpack.c.l.b16 %v390
        %v403 = vpack.c.b16 %v400, %v399
        %v404 = vpack.c.b16 %v402, %v401
        %vm407 = vcmask 261120
        %v409 = vsel %vm407, %v386, 0
        %411 = vmatpush.bf16.msra.mxu0 0
        %412 = vmatpush.bf16.msra.mxu0 0
        %413 = vmatpush.bf16.msra.mxu0 0
        %414 = vmatpush.bf16.msra.mxu0 0
        %415 = vmatpush.bf16.msra.mxu0 0
        %416 = vmatpush.bf16.msra.mxu0 0
        %417 = vmatpush.bf16.msra.mxu0 %v404
        %418 = vmatpush.bf16.msra.mxu0 %v403
        %419 = vmatmul.bf16.gmra.mxu0 %v409
        %v420 = vpop.f32.mrf.mxu0
        %v421 = vadd.f32 %v393, %v420
        %v422 = vpop.f32.mrf.mxu0
        %423 = vdwg.mxu0
        %v424 = vpack.c.bf16 %v421, %v421
        %426 = vrot.lane.b32.xlu0 %v424, 96
        %v427 = vpop.permute.xlu0 %426
        %v429 = vsel %vm407, %v424, 0
        %v432 = vsel %vm407, %v427, 0
        %434 = vmatpush.bf16.xpose.msra.mxu0 0
        %435 = vmatpush.bf16.xpose.msra.mxu0 0
        %436 = vmatpush.bf16.xpose.msra.mxu0 0
        %437 = vmatpush.bf16.xpose.msra.mxu0 0
        %438 = vmatpush.bf16.xpose.msra.mxu0 0
        %439 = vmatpush.bf16.xpose.msra.mxu0 0
        %440 = vmatpush.bf16.xpose.msra.mxu0 0
        %441 = vmatpush.bf16.xpose.msra.mxu0 %v432
        %442 = vmatmul.bf16.gmra.mxu0 %v429
        %v443 = vpop.f32.mrf.mxu0
        %v444 = vadd.f32 0.0, %v443
        %v445 = vpop.f32.mrf.mxu0
        %446 = vdwg.mxu0
        %v447 = vmul.f32 %v444, 0.17677669
        %v448 = vlaneseq
        %v449 = vshrl.u32 %v448, 7
        %v450 = vlaneseq
        %v451 = vand.u32 %v450, 127
        %vm452 = vcmp.le.s32.totalorder %v451, %v449
        %v453 = vsel %vm452, %v447, -1e+09
        %vm454 = vcmask 64512
        %v455 = vsel %vm454, %v453, -inf
        %456 = vmax.xlane.f32.xlu0 %v455
        %v457 = vpop.xlane.xlu0 %456
        %v458 = vsub.f32 %v453, %v457
        %v459 = vmul.f32 %v458, 1.442695
        %v460 = vpow.pop %v459
        %v461 = vsel %vm454, %v460, 0.0
        %462 = vadd.xlane.f32.xlu0 %v461
        %v463 = vpop.xlane.xlu0 %462
        %v464 = vrcp.pop %v463
        %v465 = vmul.f32 %v460, %v464
        %v466 = vpack.c.bf16 %v465, %v465
        %467 = vrot.lane.b32.xlu0 %v424, 64
        %v468 = vpop.permute.xlu0 %467
        %v470 = vsel %vm454, %v466, 0
        %vm472 = vcmask 1043456
        %v474 = vsel %vm472, %v468, 0
        %476 = vmatpush.bf16.msra.mxu0 0
        %477 = vmatpush.bf16.msra.mxu0 0
        %478 = vmatpush.bf16.msra.mxu0 0
        %479 = vmatpush.bf16.msra.mxu0 0
        %480 = vmatpush.bf16.msra.mxu0 0
        %481 = vmatpush.bf16.msra.mxu0 0
        %482 = vmatpush.bf16.msra.mxu0 0
        %483 = vmatpush.bf16.msra.mxu0 %v474
        %484 = vmatmul.bf16.gmra.mxu0 %v470
        %v485 = vpop.f32.mrf.mxu0
        %v486 = vadd.f32 0.0, %v485
        %v487 = vpop.f32.mrf.mxu0
        %488 = vdwg.mxu0
        %v489 = vsel %vm407, %v486, 0.0
        %490 = vadd.xlane.f32.xlu0 %v489
        %v491 = vpop.xlane.xlu0 %490
        %v492 = vrcp.pop 32.0
        %v493 = vmul.f32 32.0, %v492
        %v494 = vsub.f32 1.0, %v493
        %v495 = vmul.f32 %v492, %v494
        %v496 = vadd.f32 %v492, %v495
        %vm497 = vweird.f32 %v492
        %v498 = vsel %vm497, %v492, %v496
        %v499 = vmul.f32 %v491, %v498
        %v500 = vsub.f32 %v486, %v499
        %v501 = vmul.f32 %v500, %v500
        %v502 = vsel %vm407, %v501, 0.0
        %503 = vadd.xlane.f32.xlu0 %v502
        %v504 = vpop.xlane.xlu0 %503
        %v505 = vmul.f32 %v504, %v498
        %v506 = vadd.f32 %v505, 1e-05
        %v507 = vrsqrt.pop %v506
        %v508 = vmul.f32 %v507, %v506
        %v509 = vmul.f32 %v508, %v507
        %v510 = vmul.f32 0.5, %v509
        %v511 = vsub.f32 1.5, %v510
        %v512 = vmul.f32 %v507, %v511
        %vm513 = vweird.f32 %v506
        %vm514 = vweird.f32 %v507
        %vm515 = vmor %vm513, %vm514
        %v516 = vsel %vm515, %v507, %v512
        %v517 = vmul.f32 %v500, %v516
        %v518 = vld [vmem:[%s376] sm:$0x1]
        %v520 = vperm.slane %v518, 0
        %v522 = vmul.f32 %v517, %v520
        %v523 = vld [vmem:[%s330] sm:$0x1]
        %v525 = vperm.slane %v523, 0
        %v527 = vadd.f32 %v522, %v525
        %v528 = vmul.f32 %v527, 0.5
        %v529 = vmul.f32 %v527, 0.70710677
        %v530 = vmul.f32 %v529, %v529
        %v531 = vmin.f32 16.0, %v530
        %v532 = vmul.f32 %v531, 2.1237322e-06
        %v533 = vadd.f32 %v532, 0.00028619796
        %v534 = vmul.f32 %v531, %v533
        %v535 = vadd.f32 %v534, 0.0036580483
        %v536 = vmul.f32 %v531, %v535
        %v537 = vadd.f32 %v536, 0.05243302
        %v538 = vmul.f32 %v531, %v537
        %v539 = vadd.f32 %v538, 0.18741608
        %v540 = vmul.f32 %v531, %v539
        %v541 = vadd.f32 %v540, 1.1283791
        %v542 = vmul.f32 %v529, %v541
        %v543 = vmul.f32 %v531, 3.8918573e-05
        %v544 = vadd.f32 %v543, 0.001143296
        %v545 = vmul.f32 %v531, %v544
        %v546 = vadd.f32 %v545, 0.014752088
        %v547 = vmul.f32 %v531, %v546
        %v548 = vadd.f32 %v547, 0.112945676
        %v549 = vmul.f32 %v531, %v548
        %v550 = vadd.f32 %v549, 0.4994258
        %v551 = vmul.f32 %v531, %v550
        %v552 = vadd.f32 %v551, 1.0
        %v553 = vrcp.pop %v552
        %v554 = vmul.f32 %v552, %v553
        %v555 = vsub.f32 1.0, %v554
        %v556 = vmul.f32 %v553, %v555
        %v557 = vadd.f32 %v553, %v556
        %vm558 = vweird.f32 %v552
        %vm559 = vweird.f32 %v553
        %vm560 = vmor %vm558, %vm559
        %v561 = vsel %vm560, %v553, %v557
        %v562 = vand.u32 2147483647, %v552
        %vm563 = vcmp.eq.f32.partialorder %v562, 8.507059e+37
        %v564 = vand.u32 %v552, 2147483648
        %v565 = vor.u32 1.1754944e-38, %v564
        %v566 = vsel %vm563, %v565, %v561
        %v567 = vmul.f32 %v542, %v566
        %v568 = vmin.f32 %v567, 1.0
        %v569 = vmax.f32 %v568, -1.0
        %v570 = vadd.f32 %v569, 1.0
        %v571 = vmul.f32 %v528, %v570
        %v572 = vadd.f32 %v571, %v385
        %573 = vst.msk [vmem:[#allocation2] sm:$0xff] %vm407, %v572
        %574 = vst.msk [vmem:[%s373] sm:$0xff] %vm407, %v572
        %s575 = sand.u32 %s178, 1
        %s576 = scalar_lea.sflag [#allocation5], %s575
        %s577 = sand.u32 %s178, 1
        %s578 = smul.addr %s577, 8
        %s579 = scalar_lea.vmem [#allocation11], %s578
        // Predicated region
        $region61: #{tpu_custom_call.1} parent=39 // pred_check
          %p580 = pneg %p188
        $region62: #{tpu_custom_call.1} parent=39 // pred_check_branch
          %582 = sbr.rel (%p580) target = $region64
        $region63: #{tpu_custom_call.1} parent=39 // pred_region
          %584 = vsyncadd %s576, 0
          %s585 = smul.addr %s32, 8
          %s586 = scalar_lea.hbm %s5, %s585
          %s588 = sshll.u32 %s579, 4
          %s589 = int_to_ptr.vmem [resolvable:$true] %s588
          %s590 = sshll.u32 %s586, 4
          %s591 = int_to_ptr.hbm [resolvable:$true] %s590
          %593 = dma.vmem_to_hbm [thread:$0]  %s589, 128, %s591, %s576
        $region64: #{tpu_custom_call.1} parent=39 // pred_fallthru
          _
      $region40: #{tpu_custom_call.1} parent=5 // pred_fallthru
        _
      %p594 = scmp.le.s32.totalorder 2, %s23
      // Predicated region
      $region65: #{tpu_custom_call.1} parent=5 // pred_check
        %p595 = pneg %p594
      $region66: #{tpu_custom_call.1} parent=5 // pred_check_branch
        %597 = sbr.rel (%p595) target = $region68
      $region67: #{tpu_custom_call.1} parent=5 // pred_region
        %s598 = ssub.s32 %s23, 2
        // Predicated region
        $region69: #{tpu_custom_call.1} parent=67 // pred_check
          %p599 = pneg %p194
        $region70: #{tpu_custom_call.1} parent=67 // pred_check_branch
          %601 = sbr.rel (%p599) target = $region72
        $region71: #{tpu_custom_call.1} parent=67 // pred_region
          %s602 = sand.u32 %s179, 1
          %s603 = scalar_lea.sflag [#allocation5], %s602
          %s604 = sand.u32 %s179, 1
          %s605 = smul.addr %s604, 8
          %s606 = scalar_lea.vmem [#allocation11], %s605
          %608 = dma.done %s603, 128
        $region72: #{tpu_custom_call.1} parent=67 // pred_fallthru
          _
      $region68: #{tpu_custom_call.1} parent=5 // pred_fallthru
        _
    $region6: #{tpu_custom_call.1} parent=1 // loop_footer
      %s27 = sadd.s32 1, %s23
    $region7: #{tpu_custom_call.1} parent=1 // loop_footer_branch
      %22 = sbr.rel target = $region3
    $region8: #{tpu_custom_call.1} parent=1 // loop_exit
      _
    %609 = vsyncpa [#allocation4], 1
    %s610 = scalar_lea.sflag [#allocation4], 1
    %611 = vsyncpa %s610, 1
    %612 = vsyncpa [#allocation7], 1
    %s613 = scalar_lea.sflag [#allocation7], 1
    %614 = vsyncpa %s613, 1
    %615 = vsyncpa [#allocation10], 1
    %s616 = scalar_lea.sflag [#allocation10], 1
    %617 = vsyncpa %s616, 1
    %618 = vsyncpa [#allocation5], 1
    %s619 = scalar_lea.sflag [#allocation5], 1
    %620 = vsyncpa %s619, 1

</llo_original>
